<compile_context>
chip_gen: v7x
topology: tpu7x:2x2x1
jax: 0.10.0
libtpu: 0.0.40
codegen_flags: <defaults>
</compile_context>

<pallas_src>
import functools

import jax
import jax.numpy as jnp
from jax.experimental import pallas as pl
from jax.experimental.pallas import tpu as pltpu


def _round_up(x, m):
    return ((x + m - 1) // m) * m


def _cdiv(a, b):
    return (a + b - 1) // b


def _normalize_activation(activation):
    # PyTorch module: anything other than 'relu' / 'tanh' -> ReLU.
    return activation if activation in ("relu", "tanh") else "relu"


# ----------------------------- Pallas kernel --------------------------------
def _fused_mlp_kernel(*refs, num_layers, activation):
    """Fully fused MLP: h = act(h @ w_l + shift_l) for hidden layers, then the
    final linear layer with no activation.

    refs = (x_ref, w_0, shift_0, ..., w_{L-1}, shift_{L-1}, o_ref)
      x_ref:     (TM, F0)            f32, true input width (no lane pad)
      w_l:       (K_l, F_{l+1}_pad)  bf16, bias + BN already folded in
      shift_l:   (1, F_{l+1}_pad)    f32
      o_ref:     (TM, F_L_pad)       f32
    """
    x_ref = refs[0]
    o_ref = refs[-1]
    h = x_ref[...]                                   # f32
    for l in range(num_layers):
        w_ref = refs[1 + 2 * l]
        s_ref = refs[2 + 2 * l]
        # bf16 x bf16 -> f32 accumulate on the MXU.
        h = jnp.dot(h.astype(jnp.bfloat16), w_ref[...],
                    preferred_element_type=jnp.float32)
        h = h + s_ref[...]                           # f32 VPU
        if l < num_layers - 1:                       # hidden layers only
            if activation == "tanh":
                h = jnp.tanh(h)
            else:
                h = jnp.maximum(h, 0.0)
    o_ref[...] = h.astype(o_ref.dtype)


# ------------------------------- forward pass --------------------------------
@functools.partial(jax.jit, static_argnames=("activation", "output_size"))
def bpnn_forward(x, padded_params, activation="relu", output_size=1):
    """Single fused pallas_call over the whole MLP.

    padded_params: tuple of (w_bf16, shift_f32) per layer; w lane-padded to a
    multiple of 128 in N (and, except for the first layer, in K).
    """
    activation = _normalize_activation(activation)
    n, f_in = x.shape
    assert padded_params[0][0].shape[0] == f_in, (padded_params[0][0].shape, f_in)
    f_out_pad = padded_params[-1][0].shape[1]
    f_max_pad = max(w.shape[1] for w, _ in padded_params)
    num_layers = len(padded_params)

    # ---- batch tiling: big tiles, avoid near-empty trailing tile, >=2 tiles
    # once n >= 32 so the parallel grid axis shards across both v7x TCs.
    TM_MAX = 1024
    min_tiles = 2 if n >= 32 else 1
    num_tiles = max(_cdiv(n, TM_MAX), min_tiles)
    tm = _round_up(_cdiv(n, num_tiles), 16)          # 16: bf16 sublane packing
    n_pad = _round_up(n, tm)
    grid = (n_pad // tm,)

    # Only batch (sublane) padding for x -- no lane padding round-trip.
    if n_pad == n:
        x_pad = x.astype(jnp.float32)
    else:
        x_pad = jnp.pad(x.astype(jnp.float32), ((0, n_pad - n), (0, 0)))

    # ---- resident VMEM budget (weights single-buffered, x/out double-buffered)
    weight_bytes = sum(w.size * 2 + s.size * 4 for w, s in padded_params)
    io_bytes = 2 * tm * (f_in + f_out_pad) * 4
    tmp_bytes = 2 * tm * f_max_pad * 4               # inter-layer f32/bf16 temps
    assert weight_bytes <= 40 * 1024 * 1024, (
        "resident bf16 weights exceed the v7x VMEM budget; "
        "streaming fallback not implemented (see TODO at top of file)")
    vmem_limit = min(
        int(1.25 * (weight_bytes + io_bytes + tmp_bytes)) + (16 << 20),
        64 << 20)

    # ---- cost estimate (advisory, lets XLA schedule around the fused kernel)
    flops = 2 * n_pad * sum(w.shape[0] * w.shape[1] for w, _ in padded_params)
    transcendentals = (
        n_pad * sum(w.shape[1] for w, _ in padded_params[:-1])
        if activation == "tanh" else 0)
    bytes_accessed = (x_pad.size * 4 + weight_bytes + n_pad * f_out_pad * 4)

    kernel = functools.partial(_fused_mlp_kernel,
                               num_layers=num_layers, activation=activation)

    in_specs = [pl.BlockSpec((tm, f_in), lambda i: (i, 0))]
    flat_args = [x_pad]
    for w, s in padded_params:
        # Constant index_map across the grid -> single-buffered residents.
        in_specs.append(pl.BlockSpec(w.shape, lambda i: (0, 0),
                                     pipeline_mode=pl.Buffered(1)))
        in_specs.append(pl.BlockSpec(s.shape, lambda i: (0, 0),
                                     pipeline_mode=pl.Buffered(1)))
        flat_args.append(w)
        flat_args.append(s)

    out_pad = pl.pallas_call(
        kernel,
        out_shape=jax.ShapeDtypeStruct((n_pad, f_out_pad), jnp.float32),
        grid=grid,
        in_specs=in_specs,
        out_specs=pl.BlockSpec((tm, f_out_pad), lambda i: (i, 0)),
        compiler_params=pltpu.CompilerParams(
            dimension_semantics=("parallel",),       # megacore on v7x
            vmem_limit_bytes=vmem_limit),
        cost_estimate=pl.CostEstimate(
            flops=flops, transcendentals=transcendentals,
            bytes_accessed=bytes_accessed),
    )(*flat_args)

    # Lane-dense padded output; slice down to the true shape in the wrapper.
    return out_pad[:n, :output_size]


# --------------------------- parameter construction --------------------------
def init_bpnn_params(key, input_size, hidden_sizes, output_size=1):
    """Deterministic init mirroring the PyTorch module's layer shapes, with
    bias + eval-mode BatchNorm folded into (w, shift).

    Linear weights ~ U(-1/sqrt(fan_in), 1/sqrt(fan_in)) like nn.Linear default.
    BatchNorm1d: gamma=1, beta=0, running_mean=0, running_var=1 (init values).
    Fold: scale = gamma/sqrt(var+eps); w' = w*scale; shift' = b*scale + beta - mean*scale.
    """
    eps = 1e-5
    sizes = [input_size] + list(hidden_sizes)
    params = []
    for i in range(len(hidden_sizes)):
        fan_in, fan_out = sizes[i], sizes[i + 1]
        key, kw, kb = jax.random.split(key, 3)
        bound = 1.0 / jnp.sqrt(jnp.float32(fan_in))
        w_t = jax.random.uniform(kw, (fan_in, fan_out), jnp.float32,
                                 -bound, bound)          # stored as (Fin, Fout)
        b = jax.random.uniform(kb, (fan_out,), jnp.float32, -bound, bound)
        gamma = jnp.ones((fan_out,), jnp.float32)
        beta = jnp.zeros((fan_out,), jnp.float32)
        run_mean = jnp.zeros((fan_out,), jnp.float32)
        run_var = jnp.ones((fan_out,), jnp.float32)
        scale = gamma / jnp.sqrt(run_var + eps)
        w = w_t * scale[None, :]
        shift = b * scale + (beta - run_mean * scale)
        params.append(dict(w=w, shift=shift))
    # Final linear layer (no BN, no activation).
    fan_in, fan_out = hidden_sizes[-1], output_size
    key, kw, kb = jax.random.split(key, 3)
    bound = 1.0 / jnp.sqrt(jnp.float32(fan_in))
    w_t = jax.random.uniform(kw, (fan_in, fan_out), jnp.float32, -bound, bound)
    b = jax.random.uniform(kb, (fan_out,), jnp.float32, -bound, bound)
    params.append(dict(w=w_t, shift=b))
    return params


def pad_params_for_kernel(params, input_size):
    """Zero-pad output feature dims to a multiple of 128 lanes (once) and cast
    weights to bf16 for the MXU.  The first layer's K stays at the true
    input_size (x is fed unpadded); later layers' K matches the previous
    layer's padded output width.  Zero rows/cols contribute nothing to the
    matmul and padded shift entries are zero, so ReLU/tanh keep padded lanes
    at exactly 0 between layers.
    """
    padded = []
    prev, prev_rows = input_size, input_size
    for layer in params:
        f_in, f_out = layer["w"].shape
        assert f_in == prev, (f_in, prev)
        f_out_pad = _round_up(f_out, 128)
        w_pad = jnp.zeros((prev_rows, f_out_pad), jnp.float32)
        w_pad = w_pad.at[:f_in, :f_out].set(layer["w"])
        s_pad = jnp.zeros((1, f_out_pad), jnp.float32)
        s_pad = s_pad.at[0, :f_out].set(layer["shift"])
        padded.append((w_pad.astype(jnp.bfloat16), s_pad))
        prev, prev_rows = f_out, f_out_pad
    return tuple(padded)


# ------------------------------ pure-JAX reference ----------------------------
def bpnn_forward_ref(x, params, activation="relu"):
    activation = _normalize_activation(activation)
    h = x
    for layer in params[:-1]:
        y = h @ layer["w"] + layer["shift"]
        h = jnp.maximum(y, 0.0) if activation == "relu" else jnp.tanh(y)
    last = params[-1]
    return h @ last["w"] + last["shift"]


# ----------------------------------- main -------------------------------------
if __name__ == "__main__":
    key = jax.random.PRNGKey(0)
    batch = 8
    input_size = 16
    hidden_sizes = [32, 16]
    output_size = 1
    activation = "relu"

    key, kx, kp = jax.random.split(key, 3)
    x = jax.random.normal(kx, (batch, input_size), jnp.float32)
    params = init_bpnn_params(kp, input_size, hidden_sizes, output_size)
    padded_params = pad_params_for_kernel(params, input_size)

    out = bpnn_forward(x, padded_params, activation=activation,
                       output_size=output_size)
    out = jax.block_until_ready(out)

    ref = bpnn_forward_ref(x, params, activation)
    assert out.shape == (batch, output_size), out.shape
    # bf16 weights/activations on the MXU -> looser tolerance vs. f32 reference.
    assert jnp.allclose(out, ref, atol=3e-2, rtol=3e-2), (out, ref)

    print("KERNEL_OK")
</pallas_src>

<mosaic_0001>
module attributes {stable_mosaic.version = 11 : i64} {
  func.func @_fused_mlp_kernel(%arg0: i32, %arg1: memref<16x16xf32, #tpu.memory_space<vmem>>, %arg2: memref<16x128xbf16, #tpu.memory_space<vmem>>, %arg3: memref<1x128xf32, #tpu.memory_space<vmem>>, %arg4: memref<128x128xbf16, #tpu.memory_space<vmem>>, %arg5: memref<1x128xf32, #tpu.memory_space<vmem>>, %arg6: memref<128x128xbf16, #tpu.memory_space<vmem>>, %arg7: memref<1x128xf32, #tpu.memory_space<vmem>>, %arg8: memref<16x128xf32, #tpu.memory_space<vmem>>) attributes {dimension_semantics = [#tpu.dimension_semantics<parallel>], iteration_bounds = array<i64: 1>, scalar_prefetch = 0 : i64, scratch_operands = 0 : i64, tpu.core_type = #tpu.core_type<tc>, window_params = [{transform_indices = @transform_0, window_bounds = array<i64: 16, 16>}, {pipeline_mode = #tpu.pipeline_mode<synchronous>, transform_indices = @transform_1, window_bounds = array<i64: 16, 128>}, {pipeline_mode = #tpu.pipeline_mode<synchronous>, transform_indices = @transform_2, window_bounds = array<i64: 1, 128>}, {pipeline_mode = #tpu.pipeline_mode<synchronous>, transform_indices = @transform_3, window_bounds = array<i64: 128, 128>}, {pipeline_mode = #tpu.pipeline_mode<synchronous>, transform_indices = @transform_4, window_bounds = array<i64: 1, 128>}, {pipeline_mode = #tpu.pipeline_mode<synchronous>, transform_indices = @transform_5, window_bounds = array<i64: 128, 128>}, {pipeline_mode = #tpu.pipeline_mode<synchronous>, transform_indices = @transform_6, window_bounds = array<i64: 1, 128>}, {transform_indices = @transform_7, window_bounds = array<i64: 16, 128>}]} {
    %c0 = arith.constant 0 : index
    %c0_0 = arith.constant 0 : index
    %0 = vector.load %arg1[%c0, %c0_0] : memref<16x16xf32, #tpu.memory_space<vmem>>, vector<16x16xf32>
    %1 = arith.truncf %0 : vector<16x16xf32> to vector<16x16xbf16>
    %c0_1 = arith.constant 0 : index
    %c0_2 = arith.constant 0 : index
    %2 = vector.load %arg2[%c0_1, %c0_2] : memref<16x128xbf16, #tpu.memory_space<vmem>>, vector<16x128xbf16>
    %cst = arith.constant dense<0.000000e+00> : vector<16x128xf32>
    %3 = tpu.matmul %1, %2, %cst {dimension_numbers = #tpu.dot_dimension_numbers<[1], [0], [0], [1], [0, 0, 1, 1], [], []>} : vector<16x16xbf16>, vector<16x128xbf16>, vector<16x128xf32> -> vector<16x128xf32>
    %c0_3 = arith.constant 0 : index
    %c0_4 = arith.constant 0 : index
    %4 = vector.load %arg3[%c0_3, %c0_4] : memref<1x128xf32, #tpu.memory_space<vmem>>, vector<1x128xf32>
    %5 = vector.broadcast %4 : vector<1x128xf32> to vector<16x128xf32>
    %6 = arith.addf %3, %5 : vector<16x128xf32>
    %cst_5 = arith.constant 0.000000e+00 : f32
    %7 = vector.broadcast %cst_5 : f32 to vector<16x128xf32>
    %8 = arith.maximumf %6, %7 : vector<16x128xf32>
    %9 = arith.truncf %8 : vector<16x128xf32> to vector<16x128xbf16>
    %c0_6 = arith.constant 0 : index
    %c0_7 = arith.constant 0 : index
    %10 = vector.load %arg4[%c0_6, %c0_7] : memref<128x128xbf16, #tpu.memory_space<vmem>>, vector<128x128xbf16>
    %cst_8 = arith.constant dense<0.000000e+00> : vector<16x128xf32>
    %11 = tpu.matmul %9, %10, %cst_8 {dimension_numbers = #tpu.dot_dimension_numbers<[1], [0], [0], [1], [0, 0, 1, 1], [], []>} : vector<16x128xbf16>, vector<128x128xbf16>, vector<16x128xf32> -> vector<16x128xf32>
    %c0_9 = arith.constant 0 : index
    %c0_10 = arith.constant 0 : index
    %12 = vector.load %arg5[%c0_9, %c0_10] : memref<1x128xf32, #tpu.memory_space<vmem>>, vector<1x128xf32>
    %13 = vector.broadcast %12 : vector<1x128xf32> to vector<16x128xf32>
    %14 = arith.addf %11, %13 : vector<16x128xf32>
    %cst_11 = arith.constant 0.000000e+00 : f32
    %15 = vector.broadcast %cst_11 : f32 to vector<16x128xf32>
    %16 = arith.maximumf %14, %15 : vector<16x128xf32>
    %17 = arith.truncf %16 : vector<16x128xf32> to vector<16x128xbf16>
    %c0_12 = arith.constant 0 : index
    %c0_13 = arith.constant 0 : index
    %18 = vector.load %arg6[%c0_12, %c0_13] : memref<128x128xbf16, #tpu.memory_space<vmem>>, vector<128x128xbf16>
    %cst_14 = arith.constant dense<0.000000e+00> : vector<16x128xf32>
    %19 = tpu.matmul %17, %18, %cst_14 {dimension_numbers = #tpu.dot_dimension_numbers<[1], [0], [0], [1], [0, 0, 1, 1], [], []>} : vector<16x128xbf16>, vector<128x128xbf16>, vector<16x128xf32> -> vector<16x128xf32>
    %c0_15 = arith.constant 0 : index
    %c0_16 = arith.constant 0 : index
    %20 = vector.load %arg7[%c0_15, %c0_16] : memref<1x128xf32, #tpu.memory_space<vmem>>, vector<1x128xf32>
    %21 = vector.broadcast %20 : vector<1x128xf32> to vector<16x128xf32>
    %22 = arith.addf %19, %21 : vector<16x128xf32>
    %c0_17 = arith.constant 0 : index
    %c0_18 = arith.constant 0 : index
    %23 = vector.load %arg8[%c0_17, %c0_18] : memref<16x128xf32, #tpu.memory_space<vmem>>, vector<16x128xf32>
    tpu.vector_store %arg8[%c0_17, %c0_18], %22 {strides = array<i32>} : memref<16x128xf32, #tpu.memory_space<vmem>>, vector<16x128xf32>,
    return
  }
  func.func @transform_0(%arg0: i32) -> (i32, i32) {
    %c0_i32 = arith.constant 0 : i32
    %c0_i32_0 = arith.constant 0 : i32
    return %arg0, %c0_i32 : i32, i32
  }
  func.func @transform_1(%arg0: i32) -> (i32, i32) {
    %c0_i32 = arith.constant 0 : i32
    %c0_i32_0 = arith.constant 0 : i32
    %c0_i32_1 = arith.constant 0 : i32
    return %c0_i32, %c0_i32_0 : i32, i32
  }
  func.func @transform_2(%arg0: i32) -> (i32, i32) {
    %c0_i32 = arith.constant 0 : i32
    %c0_i32_0 = arith.constant 0 : i32
    %c0_i32_1 = arith.constant 0 : i32
    return %c0_i32, %c0_i32_0 : i32, i32
  }
  func.func @transform_3(%arg0: i32) -> (i32, i32) {
    %c0_i32 = arith.constant 0 : i32
    %c0_i32_0 = arith.constant 0 : i32
    %c0_i32_1 = arith.constant 0 : i32
    return %c0_i32, %c0_i32_0 : i32, i32
  }
  func.func @transform_4(%arg0: i32) -> (i32, i32) {
    %c0_i32 = arith.constant 0 : i32
    %c0_i32_0 = arith.constant 0 : i32
    %c0_i32_1 = arith.constant 0 : i32
    return %c0_i32, %c0_i32_0 : i32, i32
  }
  func.func @transform_5(%arg0: i32) -> (i32, i32) {
    %c0_i32 = arith.constant 0 : i32
    %c0_i32_0 = arith.constant 0 : i32
    %c0_i32_1 = arith.constant 0 : i32
    return %c0_i32, %c0_i32_0 : i32, i32
  }
  func.func @transform_6(%arg0: i32) -> (i32, i32) {
    %c0_i32 = arith.constant 0 : i32
    %c0_i32_0 = arith.constant 0 : i32
    %c0_i32_1 = arith.constant 0 : i32
    return %c0_i32, %c0_i32_0 : i32, i32
  }
  func.func @transform_7(%arg0: i32) -> (i32, i32) {
    %c0_i32 = arith.constant 0 : i32
    %c0_i32_0 = arith.constant 0 : i32
    return %arg0, %c0_i32 : i32, i32
  }
}

</mosaic_0001>

<llo_original>
// kernel: bpnn_forward.1
$region0: #{bpnn_forward.1}
  #allocation0 [shape = 'u32[]', space=smem, size = 0x4, offset = 0x4, fixed_abs, tag = 'smem constant byte address 0x4 - core index']
  #allocation1 [shape = 'u32[144,128]{1,0:T(1,128)}', space=vmem, size = 0x12000, scoped, tag = 'internal scratch']
  %s0 = inlined_call_operand.vmem [shape: f32[16,16], index: 0, kind: input, shape index: {}]
  %s1 = inlined_call_operand.vmem [shape: bf16[16,128], index: 1, kind: input, shape index: {}]
  %s2 = inlined_call_operand.vmem [shape: f32[1,128], index: 2, kind: input, shape index: {}]
  %s3 = inlined_call_operand.hbm [shape: bf16[128,128], index: 3, kind: input, shape index: {}]
  %s4 = inlined_call_operand.vmem [shape: f32[1,128], index: 4, kind: input, shape index: {}]
  %s5 = inlined_call_operand.hbm [shape: bf16[128,128], index: 5, kind: input, shape index: {}]
  %s6 = inlined_call_operand.vmem [shape: f32[1,128], index: 6, kind: input, shape index: {}]
  %s7 = inlined_call_operand.vmem [shape: f32[16,128], index: 7, kind: output, shape index: {}]
  %s8 = sld [smem:[#allocation0]]
  $region46: #{bpnn_forward.1} parent=0
    _
  %s10 = ssub.s32 1, %s8
  %s11 = scalar_select 0, %s10, %s8
  $region1: #{bpnn_forward.1} parent=0
    #allocation2 [shape = 'u8[32768]{0}', space=vmem, size = 0x8000, scoped, tag = 'input window, operand 3, single buffered']
    #allocation3 [shape = 's32[1]{0}', space=sflag, size = 0x4, scoped, tag = 'scoped memory for bpnn_forward.1']
    #allocation4 [shape = 'u8[32768]{0}', space=vmem, size = 0x8000, scoped, tag = 'input window, operand 5, single buffered']
    #allocation5 [shape = 's32[1]{0}', space=sflag, size = 0x4, scoped, tag = 'scoped memory for bpnn_forward.1']
    %12 = vsyncpa [#allocation3], 0
    %13 = vsyncpa [#allocation5], 0
    // Predicated region
    $region2: #{bpnn_forward.1} parent=1 // pred_check
      _
    $region3: #{bpnn_forward.1} parent=1 // pred_check_branch
      %15 = sbr.rel (0) target = $region5
    $region4: #{bpnn_forward.1} parent=1 // pred_region
      _
    $region5: #{bpnn_forward.1} parent=1 // pred_fallthru
      _
    // Predicated region
    $region6: #{bpnn_forward.1} parent=1 // pred_check
      _
    $region7: #{bpnn_forward.1} parent=1 // pred_check_branch
      %17 = sbr.rel (0) target = $region9
    $region8: #{bpnn_forward.1} parent=1 // pred_region
      _
    $region9: #{bpnn_forward.1} parent=1 // pred_fallthru
      _
    // Predicated region
    $region10: #{bpnn_forward.1} parent=1 // pred_check
      _
    $region11: #{bpnn_forward.1} parent=1 // pred_check_branch
      %19 = sbr.rel (0) target = $region13
    $region12: #{bpnn_forward.1} parent=1 // pred_region
      _
    $region13: #{bpnn_forward.1} parent=1 // pred_fallthru
      _
    // Predicated region
    $region14: #{bpnn_forward.1} parent=1 // pred_check
      _
    $region15: #{bpnn_forward.1} parent=1 // pred_check_branch
      %21 = sbr.rel (0) target = $region17
    $region16: #{bpnn_forward.1} parent=1 // pred_region
      %s23 = ssub.s32 1024, 1024
      %24 = vsyncadd [#allocation3], %s23
      %s25 = sshll.u32 [#allocation2], 4
      %s26 = int_to_ptr.vmem [resolvable:$true] %s25
      %31 = dma.hbm_to_vmem [thread:$0]  %s3, 1024, %s26, [#allocation3], 64, 64, 4
    $region17: #{bpnn_forward.1} parent=1 // pred_fallthru
      _
    // Predicated region
    $region18: #{bpnn_forward.1} parent=1 // pred_check
      _
    $region19: #{bpnn_forward.1} parent=1 // pred_check_branch
      %33 = sbr.rel (0) target = $region21
    $region20: #{bpnn_forward.1} parent=1 // pred_region
      _
    $region21: #{bpnn_forward.1} parent=1 // pred_fallthru
      _
    // Predicated region
    $region22: #{bpnn_forward.1} parent=1 // pred_check
      _
    $region23: #{bpnn_forward.1} parent=1 // pred_check_branch
      %35 = sbr.rel (0) target = $region25
    $region24: #{bpnn_forward.1} parent=1 // pred_region
      %s37 = ssub.s32 1024, 1024
      %38 = vsyncadd [#allocation5], %s37
      %s39 = sshll.u32 [#allocation4], 4
      %s40 = int_to_ptr.vmem [resolvable:$true] %s39
      %45 = dma.hbm_to_vmem [thread:$0]  %s5, 1024, %s40, [#allocation5], 64, 64, 4
    $region25: #{bpnn_forward.1} parent=1 // pred_fallthru
      _
    // Predicated region
    $region26: #{bpnn_forward.1} parent=1 // pred_check
      _
    $region27: #{bpnn_forward.1} parent=1 // pred_check_branch
      %47 = sbr.rel (0) target = $region29
    $region28: #{bpnn_forward.1} parent=1 // pred_region
      _
    $region29: #{bpnn_forward.1} parent=1 // pred_fallthru
      _
    // Predicated region
    $region30: #{bpnn_forward.1} parent=1 // pred_check
      _
    $region31: #{bpnn_forward.1} parent=1 // pred_check_branch
      %49 = sbr.rel (0) target = $region33
    $region32: #{bpnn_forward.1} parent=1 // pred_region
      %50 = dma.done [#allocation3], 1024
    $region33: #{bpnn_forward.1} parent=1 // pred_fallthru
      _
    // Predicated region
    $region34: #{bpnn_forward.1} parent=1 // pred_check
      _
    $region35: #{bpnn_forward.1} parent=1 // pred_check_branch
      %52 = sbr.rel (0) target = $region37
    $region36: #{bpnn_forward.1} parent=1 // pred_region
      %53 = dma.done [#allocation5], 1024
    $region37: #{bpnn_forward.1} parent=1 // pred_fallthru
      _
    %v55 = vld [vmem:[%s0] sm:$0xff]
    %v56 = vld [vmem:[%s0 + $0x8] sm:$0xff]
    %v57 = vpack.c.bf16 %v56, %v55
    %v58 = vld [vmem:[%s1] sm:$0xf]
    %v59 = vld [vmem:[%s1 + $0x4] sm:$0xf]
    %v60 = vld [vmem:[%s2] sm:$0x1]
    %v62 = vlaneseq
    %v63 = vshrl.u32 %v62, 7
    %v64 = vsub.s32 0, %v63
    %v65 = vrot.slane %v60, %v64
    %v69 = vunpack.c.l.b16 %v58
    %v70 = vunpack.c.l.b16 %v59
    %v71 = vpack.c.b16 %v70, %v69
    %vm73 = vcmask 130048
    %v75 = vsel %vm73, %v57, 0
    %77 = vmatprep.subr.bf16.mxu0 0
    %78 = vmatpush1.bf16.msra.mxu0 %v71
    %79 = vmatprep.subr.bf16.mxu0 0
    %80 = vmatpush1.bf16.msra.mxu0 0
    %81 = vmatprep.subr.bf16.mxu0 0
    %82 = vmatpush1.bf16.msra.mxu0 0
    %83 = vmatprep.subr.bf16.mxu0 0
    %84 = vmatpush1.bf16.msra.mxu0 0
    %85 = vmatprep.subr.bf16.mxu0 0
    %86 = vmatpush1.bf16.msra.mxu0 0
    %87 = vmatprep.subr.bf16.mxu0 0
    %88 = vmatpush1.bf16.msra.mxu0 0
    %89 = vmatprep.subr.bf16.mxu0 0
    %90 = vmatpush1.bf16.msra.mxu0 0
    %91 = vmatprep.subr.bf16.mxu0 0
    %92 = vmatpush1.bf16.msra.mxu0 0
    %93 = vmatprep.subr.bf16.mxu0 0
    %94 = vmatpush1.bf16.msra.mxu0 0
    %95 = vmatprep.subr.bf16.mxu0 0
    %96 = vmatpush1.bf16.msra.mxu0 0
    %97 = vmatprep.subr.bf16.mxu0 0
    %98 = vmatpush1.bf16.msra.mxu0 0
    %99 = vmatprep.subr.bf16.mxu0 0
    %100 = vmatpush1.bf16.msra.mxu0 0
    %101 = vmatprep.subr.bf16.mxu0 0
    %102 = vmatpush1.bf16.msra.mxu0 0
    %103 = vmatprep.subr.bf16.mxu0 0
    %104 = vmatpush1.bf16.msra.mxu0 0
    %105 = vmatprep.subr.bf16.mxu0 0
    %106 = vmatpush1.bf16.msra.mxu0 0
    %107 = vmatprep.subr.bf16.mxu0 0
    %108 = vmatpush1.bf16.msra.mxu0 0
    %109 = vmatprep.mubr.bf16.mxu0 0
    %110 = vmatmul.mubr.bf16.gmra.mrb[0].mxu0 %v75
    %v111 = vpop.f32.mrb[0].mxu0
    %v112 = vadd.f32 %v65, %v111
    %v113 = vpop.f32.mrb[0].mxu0
    %v114 = vpop.f32.mrb[0].mxu0
    %v115 = vadd.f32 %v65, %v114
    %v116 = vpop.f32.mrb[0].mxu0
    %117 = vdwg.mxu0
    %v118 = vmax.f32 %v112, 0.0
    %v119 = vmax.f32 %v115, 0.0
    %v120 = vpack.c.bf16 %v119, %v118
    %v121 = vld [vmem:[#allocation2] sm:$0xf]
    %v122 = vld [vmem:[#allocation2 + $0x4] sm:$0xf]
    %v123 = vld [vmem:[#allocation2 + $0x8] sm:$0xf]
    %v124 = vld [vmem:[#allocation2 + $0xc] sm:$0xf]
    %v125 = vld [vmem:[#allocation2 + $0x10] sm:$0xf]
    %v126 = vld [vmem:[#allocation2 + $0x14] sm:$0xf]
    %v127 = vld [vmem:[#allocation2 + $0x18] sm:$0xf]
    %v128 = vld [vmem:[#allocation2 + $0x1c] sm:$0xf]
    %v129 = vld [vmem:[#allocation2 + $0x20] sm:$0xf]
    %v130 = vld [vmem:[#allocation2 + $0x24] sm:$0xf]
    %v131 = vld [vmem:[#allocation2 + $0x28] sm:$0xf]
    %v132 = vld [vmem:[#allocation2 + $0x2c] sm:$0xf]
    %v133 = vld [vmem:[#allocation2 + $0x30] sm:$0xf]
    %v134 = vld [vmem:[#allocation2 + $0x34] sm:$0xf]
    %v135 = vld [vmem:[#allocation2 + $0x38] sm:$0xf]
    %v136 = vld [vmem:[#allocation2 + $0x3c] sm:$0xf]
    %v137 = vld [vmem:[%s4] sm:$0x1]
    %v139 = vlaneseq
    %v140 = vshrl.u32 %v139, 7
    %v141 = vsub.s32 0, %v140
    %v142 = vrot.slane %v137, %v141
    %v160 = vunpack.c.l.b16 %v121
    %v161 = vunpack.c.l.b16 %v122
    %v162 = vunpack.c.l.b16 %v123
    %v163 = vunpack.c.l.b16 %v124
    %v164 = vunpack.c.l.b16 %v125
    %v165 = vunpack.c.l.b16 %v126
    %v166 = vunpack.c.l.b16 %v127
    %v167 = vunpack.c.l.b16 %v128
    %v168 = vunpack.c.l.b16 %v129
    %v169 = vunpack.c.l.b16 %v130
    %v170 = vunpack.c.l.b16 %v131
    %v171 = vunpack.c.l.b16 %v132
    %v172 = vunpack.c.l.b16 %v133
    %v173 = vunpack.c.l.b16 %v134
    %v174 = vunpack.c.l.b16 %v135
    %v175 = vunpack.c.l.b16 %v136
    %v176 = vpack.c.b16 %v161, %v160
    %v177 = vpack.c.b16 %v163, %v162
    %v178 = vpack.c.b16 %v165, %v164
    %v179 = vpack.c.b16 %v167, %v166
    %v180 = vpack.c.b16 %v169, %v168
    %v181 = vpack.c.b16 %v171, %v170
    %v182 = vpack.c.b16 %v173, %v172
    %v183 = vpack.c.b16 %v175, %v174
    %192 = vmatprep.subr.bf16.mxu0 0
    %193 = vmatpush1.bf16.msra.mxu0 %v176
    %194 = vmatprep.subr.bf16.mxu0 0
    %195 = vmatpush1.bf16.msra.mxu0 %v177
    %196 = vmatprep.subr.bf16.mxu0 0
    %197 = vmatpush1.bf16.msra.mxu0 %v178
    %198 = vmatprep.subr.bf16.mxu0 0
    %199 = vmatpush1.bf16.msra.mxu0 %v179
    %200 = vmatprep.subr.bf16.mxu0 0
    %201 = vmatpush1.bf16.msra.mxu0 %v180
    %202 = vmatprep.subr.bf16.mxu0 0
    %203 = vmatpush1.bf16.msra.mxu0 %v181
    %204 = vmatprep.subr.bf16.mxu0 0
    %205 = vmatpush1.bf16.msra.mxu0 %v182
    %206 = vmatprep.subr.bf16.mxu0 0
    %207 = vmatpush1.bf16.msra.mxu0 %v183
    %208 = vmatprep.subr.bf16.mxu0 0
    %209 = vmatpush1.bf16.msra.mxu0 0
    %210 = vmatprep.subr.bf16.mxu0 0
    %211 = vmatpush1.bf16.msra.mxu0 0
    %212 = vmatprep.subr.bf16.mxu0 0
    %213 = vmatpush1.bf16.msra.mxu0 0
    %214 = vmatprep.subr.bf16.mxu0 0
    %215 = vmatpush1.bf16.msra.mxu0 0
    %216 = vmatprep.subr.bf16.mxu0 0
    %217 = vmatpush1.bf16.msra.mxu0 0
    %218 = vmatprep.subr.bf16.mxu0 0
    %219 = vmatpush1.bf16.msra.mxu0 0
    %220 = vmatprep.subr.bf16.mxu0 0
    %221 = vmatpush1.bf16.msra.mxu0 0
    %222 = vmatprep.subr.bf16.mxu0 0
    %223 = vmatpush1.bf16.msra.mxu0 0
    %224 = vmatprep.mubr.bf16.mxu0 0
    %225 = vmatmul.mubr.bf16.gmra.mrb[0].mxu0 %v120
    %v226 = vpop.f32.mrb[0].mxu0
    %v227 = vadd.f32 %v142, %v226
    %v228 = vpop.f32.mrb[0].mxu0
    %v229 = vpop.f32.mrb[0].mxu0
    %v230 = vadd.f32 %v142, %v229
    %v231 = vpop.f32.mrb[0].mxu0
    %232 = vdwg.mxu0
    %v233 = vmax.f32 %v227, 0.0
    %v234 = vmax.f32 %v230, 0.0
    %v235 = vpack.c.bf16 %v234, %v233
    %v236 = vld [vmem:[#allocation4] sm:$0xf]
    %v237 = vld [vmem:[#allocation4 + $0x4] sm:$0xf]
    %v238 = vld [vmem:[#allocation4 + $0x8] sm:$0xf]
    %v239 = vld [vmem:[#allocation4 + $0xc] sm:$0xf]
    %v240 = vld [vmem:[#allocation4 + $0x10] sm:$0xf]
    %v241 = vld [vmem:[#allocation4 + $0x14] sm:$0xf]
    %v242 = vld [vmem:[#allocation4 + $0x18] sm:$0xf]
    %v243 = vld [vmem:[#allocation4 + $0x1c] sm:$0xf]
    %v244 = vld [vmem:[#allocation4 + $0x20] sm:$0xf]
    %v245 = vld [vmem:[#allocation4 + $0x24] sm:$0xf]
    %v246 = vld [vmem:[#allocation4 + $0x28] sm:$0xf]
    %v247 = vld [vmem:[#allocation4 + $0x2c] sm:$0xf]
    %v248 = vld [vmem:[#allocation4 + $0x30] sm:$0xf]
    %v249 = vld [vmem:[#allocation4 + $0x34] sm:$0xf]
    %v250 = vld [vmem:[#allocation4 + $0x38] sm:$0xf]
    %v251 = vld [vmem:[#allocation4 + $0x3c] sm:$0xf]
    %v252 = vld [vmem:[%s6] sm:$0x1]
    %v254 = vlaneseq
    %v255 = vshrl.u32 %v254, 7
    %v256 = vsub.s32 0, %v255
    %v257 = vrot.slane %v252, %v256
    %v275 = vunpack.c.l.b16 %v236
    %v276 = vunpack.c.l.b16 %v237
    %v277 = vunpack.c.l.b16 %v238
    %v278 = vunpack.c.l.b16 %v239
    %v279 = vunpack.c.l.b16 %v240
    %v280 = vunpack.c.l.b16 %v241
    %v281 = vunpack.c.l.b16 %v242
    %v282 = vunpack.c.l.b16 %v243
    %v283 = vunpack.c.l.b16 %v244
    %v284 = vunpack.c.l.b16 %v245
    %v285 = vunpack.c.l.b16 %v246
    %v286 = vunpack.c.l.b16 %v247
    %v287 = vunpack.c.l.b16 %v248
    %v288 = vunpack.c.l.b16 %v249
    %v289 = vunpack.c.l.b16 %v250
    %v290 = vunpack.c.l.b16 %v251
    %v291 = vpack.c.b16 %v276, %v275
    %v292 = vpack.c.b16 %v278, %v277
    %v293 = vpack.c.b16 %v280, %v279
    %v294 = vpack.c.b16 %v282, %v281
    %v295 = vpack.c.b16 %v284, %v283
    %v296 = vpack.c.b16 %v286, %v285
    %v297 = vpack.c.b16 %v288, %v287
    %v298 = vpack.c.b16 %v290, %v289
    %307 = vmatprep.subr.bf16.mxu0 0
    %308 = vmatpush1.bf16.msra.mxu0 %v291
    %309 = vmatprep.subr.bf16.mxu0 0
    %310 = vmatpush1.bf16.msra.mxu0 %v292
    %311 = vmatprep.subr.bf16.mxu0 0
    %312 = vmatpush1.bf16.msra.mxu0 %v293
    %313 = vmatprep.subr.bf16.mxu0 0
    %314 = vmatpush1.bf16.msra.mxu0 %v294
    %315 = vmatprep.subr.bf16.mxu0 0
    %316 = vmatpush1.bf16.msra.mxu0 %v295
    %317 = vmatprep.subr.bf16.mxu0 0
    %318 = vmatpush1.bf16.msra.mxu0 %v296
    %319 = vmatprep.subr.bf16.mxu0 0
    %320 = vmatpush1.bf16.msra.mxu0 %v297
    %321 = vmatprep.subr.bf16.mxu0 0
    %322 = vmatpush1.bf16.msra.mxu0 %v298
    %323 = vmatprep.subr.bf16.mxu0 0
    %324 = vmatpush1.bf16.msra.mxu0 0
    %325 = vmatprep.subr.bf16.mxu0 0
    %326 = vmatpush1.bf16.msra.mxu0 0
    %327 = vmatprep.subr.bf16.mxu0 0
    %328 = vmatpush1.bf16.msra.mxu0 0
    %329 = vmatprep.subr.bf16.mxu0 0
    %330 = vmatpush1.bf16.msra.mxu0 0
    %331 = vmatprep.subr.bf16.mxu0 0
    %332 = vmatpush1.bf16.msra.mxu0 0
    %333 = vmatprep.subr.bf16.mxu0 0
    %334 = vmatpush1.bf16.msra.mxu0 0
    %335 = vmatprep.subr.bf16.mxu0 0
    %336 = vmatpush1.bf16.msra.mxu0 0
    %337 = vmatprep.subr.bf16.mxu0 0
    %338 = vmatpush1.bf16.msra.mxu0 0
    %339 = vmatprep.mubr.bf16.mxu0 0
    %340 = vmatmul.mubr.bf16.gmra.mrb[0].mxu0 %v235
    %v341 = vpop.f32.mrb[0].mxu0
    %v342 = vadd.f32 %v257, %v341
    %v343 = vpop.f32.mrb[0].mxu0
    %v344 = vpop.f32.mrb[0].mxu0
    %v345 = vadd.f32 %v257, %v344
    %v346 = vpop.f32.mrb[0].mxu0
    %347 = vdwg.mxu0
    %348 = vst [vmem:[%s7] sm:$0xff] %v342
    %349 = vst [vmem:[%s7 + $0x8] sm:$0xff] %v345
    // Predicated region
    $region38: #{bpnn_forward.1} parent=1 // pred_check
      _
    $region39: #{bpnn_forward.1} parent=1 // pred_check_branch
      %351 = sbr.rel (0) target = $region41
    $region40: #{bpnn_forward.1} parent=1 // pred_region
      _
    $region41: #{bpnn_forward.1} parent=1 // pred_fallthru
      _
    // Predicated region
    $region42: #{bpnn_forward.1} parent=1 // pred_check
      _
    $region43: #{bpnn_forward.1} parent=1 // pred_check_branch
      %353 = sbr.rel (0) target = $region45
    $region44: #{bpnn_forward.1} parent=1 // pred_region
      _
    $region45: #{bpnn_forward.1} parent=1 // pred_fallthru
      _
    %354 = vsyncpa [#allocation3], 1
    %355 = vsyncpa [#allocation5], 1

</llo_original>
